<compile_context>
chip_gen: v7x
topology: tpu7x:2x2x1
jax: 0.10.0
libtpu: 0.0.40
codegen_flags: <defaults>
</compile_context>

<pallas_src>
import jax
import jax.numpy as jnp
from jax import lax
from jax.experimental import pallas as pl
from jax.experimental.pallas import tpu as pltpu


def _round_down(n, m):
    return (n // m) * m


# ----------------------------------------------------------------------------
# Kernels
# ----------------------------------------------------------------------------
def _make_mean_kernel(use_square, n_rows, tb, steps, need_mask):
    """mse / mae: per-core running (8, D) partial sum, scalar finalize."""

    def kernel(x_ref, y_ref, o_ref, acc_ref):
        c = pl.program_id(0)          # core-split index ('parallel')
        i = pl.program_id(1)          # row-tile index within this core ('arbitrary')

        @pl.when(i == 0)
        def _init():
            acc_ref[...] = jnp.zeros_like(acc_ref)

        # Cast in-kernel: inputs stream in their native (possibly narrow) dtype.
        x = x_ref[...].astype(jnp.float32)
        y = y_ref[...].astype(jnp.float32)
        d = x - y
        v = d * d if use_square else jnp.abs(d)

        if need_mask:
            # Mask rows past the true batch (partial last tile and the fully
            # masked overhang tile whose DMA index was clamped in the map).
            row0 = (c * steps + i) * tb
            rows = row0 + lax.broadcasted_iota(jnp.int32, (tb, 1), 0)
            v = jnp.where(rows < n_rows, v, 0.0)

        dp = v.shape[-1]
        if tb % 8 == 0:
            # Fold (tb, D) into the vreg-shaped (8, D) accumulator: tb/8 pure
            # VPU vector adds, no per-step cross-lane XLU reduction.
            acc_ref[...] += jnp.sum(v.reshape(tb // 8, 8, dp), axis=0)
        else:
            # Tiny full-dim row block (B < 8): single sublane reduce.
            acc_ref[0:1, :] = acc_ref[0:1, :] + jnp.sum(v, axis=0, keepdims=True)

        @pl.when(i == pl.num_programs(1) - 1)
        def _finalize():
            # Single cross-lane/sublane reduce per core; splat fills the block.
            o_ref[...] = jnp.zeros_like(o_ref) + jnp.sum(acc_ref[...])

    return kernel


def _cosine_kernel(x_ref, y_ref, o_ref):
    # Faithful to torch.nn.CosineSimilarity(dim=1, eps=1e-8) / ATen:
    #   cos = w12 * rsqrt(max(w11 * w22, eps^2))
    x = x_ref[...].astype(jnp.float32)
    y = y_ref[...].astype(jnp.float32)
    w12 = jnp.sum(x * y, axis=-1, keepdims=True)
    w11 = jnp.sum(x * x, axis=-1, keepdims=True)
    w22 = jnp.sum(y * y, axis=-1, keepdims=True)
    eps2 = jnp.float32(1e-8 * 1e-8)
    o_ref[...] = 1.0 - w12 * lax.rsqrt(jnp.maximum(w11 * w22, eps2))


# ----------------------------------------------------------------------------
# Wrapper
# ----------------------------------------------------------------------------
def direction_loss(x, y, loss_type="mse", row_tile=None):
    """Pallas implementation of DirectionLoss(loss_type).forward(x, y)."""
    if x.ndim != 2 or x.shape != y.shape:
        raise ValueError("expected x, y of identical shape (B, D)")
    B, D = x.shape
    out_dtype = jnp.result_type(x.dtype, y.dtype)

    # Sublane granularity of the narrowest input dtype (f32: 8, bf16: 16, i8: 32).
    min_itemsize = min(x.dtype.itemsize, y.dtype.itemsize)
    sub = 8 * max(1, 4 // min_itemsize)

    # --- VMEM budget (generation-aware) --------------------------------------
    # We request a 48 MiB scoped VMEM limit explicitly: safe on v7x (64 MiB
    # physical), trivially safe on v5e/v6e (128 MiB physical), and it overrides
    # v5e's 16 MiB *default* scoped limit.  Accounted per-row bytes include the
    # 2x-double-buffered inputs AND ~3 in-kernel f32 temporaries; we keep the
    # accounted total <= 24 MiB so there is 2x headroom under the 48 MiB limit.
    vmem_limit = 48 * 1024 * 1024
    bytes_per_row = 2 * (x.dtype.itemsize + y.dtype.itemsize) * D + 3 * 4 * D
    budget = 24 * 1024 * 1024
    tb_cap = max(sub, min(8192, _round_down(budget // bytes_per_row, sub)))

    if B >= sub:
        tb_max = _round_down(B, sub)
        if row_tile is not None:
            tb = min(max(sub, _round_down(row_tile, sub)), tb_max)
        else:
            tb = min(tb_cap, tb_max)
            # Keep >= 2 row tiles so both v7x TensorCores get work.
            if B >= 2 * sub:
                tb = min(tb, max(sub, _round_down(B // 2, sub)))
    else:
        tb = B  # full-dim row block (valid even when not a multiple of 8)

    n_tiles = pl.cdiv(B, tb)
    in_block = (tb, D)  # D kept whole -> no padding, no extra HBM traffic
    in_bytes = B * D * (x.dtype.itemsize + y.dtype.itemsize)

    if loss_type == "cosine":
        out = pl.pallas_call(
            _cosine_kernel,
            out_shape=jax.ShapeDtypeStruct((B, 1), jnp.float32),
            grid=(n_tiles,),
            in_specs=[pl.BlockSpec(in_block, lambda i: (i, 0)),
                      pl.BlockSpec(in_block, lambda i: (i, 0))],
            out_specs=pl.BlockSpec((tb, 1), lambda i: (i, 0)),
            compiler_params=pltpu.CompilerParams(
                dimension_semantics=("parallel",),
                vmem_limit_bytes=vmem_limit),
            cost_estimate=pl.CostEstimate(
                flops=int(6 * B * D), transcendentals=int(B),
                bytes_accessed=int(in_bytes + 4 * B)),
        )(x, y)
        # TODO(synk): a lane-dense (rows->lanes) output layout would avoid
        # masked vst.msk stores for very large B; negligible at CLIP scale.
        return out[:, 0].astype(out_dtype)

    if loss_type not in ("mse", "mae"):
        raise ValueError(f"unknown loss_type: {loss_type}")

    # 2-way core split of the reduction (megacore on v7x); each core owns its
    # own (8, 128) partial-sum output block, summed in the wrapper.
    n_cores = 2 if n_tiles >= 2 else 1
    steps = pl.cdiv(n_tiles, n_cores)
    need_mask = (n_cores * steps * tb) != B

    def in_map(c, i):
        # Clamp so a (fully-masked) overhang tile still issues an in-bounds DMA.
        return (jnp.minimum(c * steps + i, n_tiles - 1), 0)

    kernel = _make_mean_kernel(loss_type == "mse", B, tb, steps, need_mask)
    partials = pl.pallas_call(
        kernel,
        out_shape=jax.ShapeDtypeStruct((8, 128 * n_cores), jnp.float32),
        grid=(n_cores, steps),
        in_specs=[pl.BlockSpec(in_block, in_map),
                  pl.BlockSpec(in_block, in_map)],
        out_specs=pl.BlockSpec((8, 128), lambda c, i: (0, c)),
        scratch_shapes=[pltpu.VMEM((8, D), jnp.float32)],
        compiler_params=pltpu.CompilerParams(
            dimension_semantics=("parallel", "arbitrary"),
            vmem_limit_bytes=vmem_limit),
        cost_estimate=pl.CostEstimate(
            flops=int(3 * B * D), transcendentals=0,
            bytes_accessed=int(in_bytes + 8 * 128 * n_cores * 4)),
    )(x, y)

    total = jnp.sum(partials[0, ::128])  # one partial per core
    return (total * (1.0 / (B * D))).astype(out_dtype)


# ----------------------------------------------------------------------------
# Self-test
# ----------------------------------------------------------------------------
if __name__ == "__main__":
    key = jax.random.PRNGKey(0)
    ks = jax.random.split(key, 8)

    def ref_losses(x, y):
        xf, yf = x.astype(jnp.float32), y.astype(jnp.float32)
        mse = jnp.mean((xf - yf) ** 2)
        mae = jnp.mean(jnp.abs(xf - yf))
        w12 = jnp.sum(xf * yf, axis=1)
        w11 = jnp.sum(xf * xf, axis=1)
        w22 = jnp.sum(yf * yf, axis=1)
        cos = 1.0 - w12 * lax.rsqrt(jnp.maximum(w11 * w22, 1e-16))
        return mse, mae, cos

    def check(x, y, row_tile=None, rtol=1e-4, atol=1e-5):
        mse = jax.block_until_ready(direction_loss(x, y, "mse", row_tile))
        mae = jax.block_until_ready(direction_loss(x, y, "mae", row_tile))
        cos = jax.block_until_ready(direction_loss(x, y, "cosine", row_tile))
        r_mse, r_mae, r_cos = ref_losses(x, y)
        assert mse.shape == () and mae.shape == ()
        assert cos.shape == (x.shape[0],)
        assert jnp.allclose(mse.astype(jnp.float32), r_mse, rtol=rtol, atol=atol)
        assert jnp.allclose(mae.astype(jnp.float32), r_mae, rtol=rtol, atol=atol)
        assert jnp.allclose(cos.astype(jnp.float32), r_cos, rtol=rtol, atol=atol)

    # case 1: tiny CLIP-style f32 embeddings (single full-dim row block, B < 8)
    x = jax.random.normal(ks[0], (4, 512), dtype=jnp.float32)
    y = jax.random.normal(ks[1], (4, 512), dtype=jnp.float32)
    check(x, y)

    # case 2: bf16 inputs, forced multi-tile grid + 2-way core split
    x = jax.random.normal(ks[2], (64, 256), dtype=jnp.bfloat16)
    y = jax.random.normal(ks[3], (64, 256), dtype=jnp.bfloat16)
    check(x, y, row_tile=16, rtol=2e-2, atol=2e-2)

    # case 3: unaligned B and D (full-dim blocks, no padding path at all)
    x = jax.random.normal(ks[4], (6, 100), dtype=jnp.float32)
    y = jax.random.normal(ks[5], (6, 100), dtype=jnp.float32)
    check(x, y)

    # case 4: B not a multiple of the tile -> partial last tile + masked overhang
    x = jax.random.normal(ks[6], (20, 128), dtype=jnp.float32)
    y = jax.random.normal(ks[7], (20, 128), dtype=jnp.float32)
    check(x, y)

    print("KERNEL_OK")
</pallas_src>

<mosaic_0001>
module attributes {stable_mosaic.version = 11 : i64} {
  func.func @kernel(%arg0: i32, %arg1: i32, %arg2: memref<4x512xf32, #tpu.memory_space<vmem>>, %arg3: memref<4x512xf32, #tpu.memory_space<vmem>>, %arg4: memref<8x128xf32, #tpu.memory_space<vmem>>, %arg5: memref<8x512xf32, #tpu.memory_space<vmem>>) attributes {dimension_semantics = [#tpu.dimension_semantics<parallel>, #tpu.dimension_semantics<arbitrary>], iteration_bounds = array<i64: 1, 1>, scalar_prefetch = 0 : i64, scratch_operands = 1 : i64, tpu.core_type = #tpu.core_type<tc>, window_params = [{transform_indices = @transform_0, window_bounds = array<i64: 4, 512>}, {transform_indices = @transform_1, window_bounds = array<i64: 4, 512>}, {transform_indices = @transform_2, window_bounds = array<i64: 8, 128>}]} {
    %c0_i32 = arith.constant 0 : i32
    %0 = arith.cmpi eq, %arg1, %c0_i32 : i32
    %1 = arith.extui %0 : i1 to i32
    %c0_i32_0 = arith.constant 0 : i32
    %2 = arith.cmpi ne, %1, %c0_i32_0 : i32
    scf.if %2 {
      %cst_10 = arith.constant 0.000000e+00 : f32
      %15 = vector.broadcast %cst_10 : f32 to vector<8x512xf32>
      %c0_11 = arith.constant 0 : index
      %c0_12 = arith.constant 0 : index
      %16 = vector.load %arg5[%c0_11, %c0_12] : memref<8x512xf32, #tpu.memory_space<vmem>>, vector<8x512xf32>
      tpu.vector_store %arg5[%c0_11, %c0_12], %15 {strides = array<i32>} : memref<8x512xf32, #tpu.memory_space<vmem>>, vector<8x512xf32>,
    } else {
    }
    %c0 = arith.constant 0 : index
    %c0_1 = arith.constant 0 : index
    %3 = vector.load %arg2[%c0, %c0_1] : memref<4x512xf32, #tpu.memory_space<vmem>>, vector<4x512xf32>
    %c0_2 = arith.constant 0 : index
    %c0_3 = arith.constant 0 : index
    %4 = vector.load %arg3[%c0_2, %c0_3] : memref<4x512xf32, #tpu.memory_space<vmem>>, vector<4x512xf32>
    %5 = arith.subf %3, %4 : vector<4x512xf32>
    %6 = arith.mulf %5, %5 : vector<4x512xf32>
    %c0_4 = arith.constant 0 : index
    %c0_5 = arith.constant 0 : index
    %7 = vector.load %arg5[%c0_4, %c0_5] : memref<8x512xf32, #tpu.memory_space<vmem>>, vector<1x512xf32>
    %cst = arith.constant dense<0.000000e+00> : vector<512xf32>
    %8 = vector.multi_reduction <add>, %6, %cst [0] : vector<4x512xf32> to vector<512xf32>
    %9 = vector.shape_cast %8 : vector<512xf32> to vector<1x512xf32>
    %10 = arith.addf %7, %9 : vector<1x512xf32>
    %c0_6 = arith.constant 0 : index
    %c0_7 = arith.constant 0 : index
    %11 = vector.load %arg5[%c0_6, %c0_7] : memref<8x512xf32, #tpu.memory_space<vmem>>, vector<1x512xf32>
    tpu.vector_store %arg5[%c0_6, %c0_7], %10 {strides = array<i32>} : memref<8x512xf32, #tpu.memory_space<vmem>>, vector<1x512xf32>,
    %c0_i32_8 = arith.constant 0 : i32
    %12 = arith.cmpi eq, %arg1, %c0_i32_8 : i32
    %13 = arith.extui %12 : i1 to i32
    %c0_i32_9 = arith.constant 0 : i32
    %14 = arith.cmpi ne, %13, %c0_i32_9 : i32
    scf.if %14 {
      %cst_10 = arith.constant 0.000000e+00 : f32
      %15 = vector.broadcast %cst_10 : f32 to vector<8x128xf32>
      %c0_11 = arith.constant 0 : index
      %c0_12 = arith.constant 0 : index
      %16 = vector.load %arg5[%c0_11, %c0_12] : memref<8x512xf32, #tpu.memory_space<vmem>>, vector<8x512xf32>
      %17 = vector.shape_cast %16 : vector<8x512xf32> to vector<1x8x512xf32>
      %cst_13 = arith.constant dense<0.000000e+00> : vector<1xf32>
      %18 = vector.multi_reduction <add>, %17, %cst_13 [1, 2] : vector<1x8x512xf32> to vector<1xf32>
      %19 = vector.shape_cast %18 : vector<1xf32> to vector<1x1x1xf32>
      %20 = vector.extract %19[0, 0, 0] : f32 from vector<1x1x1xf32>
      %21 = vector.broadcast %20 : f32 to vector<8x128xf32>
      %22 = arith.addf %15, %21 : vector<8x128xf32>
      %c0_14 = arith.constant 0 : index
      %c0_15 = arith.constant 0 : index
      %23 = vector.load %arg4[%c0_14, %c0_15] : memref<8x128xf32, #tpu.memory_space<vmem>>, vector<8x128xf32>
      tpu.vector_store %arg4[%c0_14, %c0_15], %22 {strides = array<i32>} : memref<8x128xf32, #tpu.memory_space<vmem>>, vector<8x128xf32>,
    } else {
    }
    return
  }
  func.func @transform_0(%arg0: i32, %arg1: i32) -> (i32, i32) {
    %c1_i32 = arith.constant 1 : i32
    %0 = arith.muli %arg0, %c1_i32 : i32
    %1 = arith.addi %0, %arg1 : i32
    %c0_i32 = arith.constant 0 : i32
    %2 = arith.minsi %1, %c0_i32 : i32
    %c0_i32_0 = arith.constant 0 : i32
    %c0_i32_1 = arith.constant 0 : i32
    return %2, %c0_i32_0 : i32, i32
  }
  func.func @transform_1(%arg0: i32, %arg1: i32) -> (i32, i32) {
    %c1_i32 = arith.constant 1 : i32
    %0 = arith.muli %arg0, %c1_i32 : i32
    %1 = arith.addi %0, %arg1 : i32
    %c0_i32 = arith.constant 0 : i32
    %2 = arith.minsi %1, %c0_i32 : i32
    %c0_i32_0 = arith.constant 0 : i32
    %c0_i32_1 = arith.constant 0 : i32
    return %2, %c0_i32_0 : i32, i32
  }
  func.func @transform_2(%arg0: i32, %arg1: i32) -> (i32, i32) {
    %c0_i32 = arith.constant 0 : i32
    %c0_i32_0 = arith.constant 0 : i32
    return %c0_i32, %arg0 : i32, i32
  }
}

</mosaic_0001>

<llo_original>
// kernel: tpu_custom_call.1
$region0: #{tpu_custom_call.1}
  #allocation0 [shape = 'u32[]', space=smem, size = 0x4, offset = 0x4, fixed_abs, tag = 'smem constant byte address 0x4 - core index']
  #allocation1 [shape = 'u32[144,128]{1,0:T(1,128)}', space=vmem, size = 0x12000, scoped, tag = 'internal scratch']
  #allocation2 [shape = 'f32[8,512]{1,0:T(8,128)}', space=vmem, size = 0x4000, scoped, tag = 'scratch operand']
  %s0 = inlined_call_operand.hbm [shape: f32[4,512], index: 0, kind: input, shape index: {}]
  %s1 = inlined_call_operand.hbm [shape: f32[4,512], index: 1, kind: input, shape index: {}]
  %s2 = inlined_call_operand.hbm [shape: f32[8,128], index: 2, kind: output, shape index: {}]
  %s3 = sld [smem:[#allocation0]]
  $region34: #{tpu_custom_call.1} parent=0
    _
  %s5 = ssub.s32 1, %s3
  %s6 = scalar_select 0, %s5, %s3
  $region1: #{tpu_custom_call.1} parent=0
    #allocation3 [shape = 'u8[8192]{0}', space=vmem, size = 0x2000, scoped, tag = 'input window, operand 0, single buffered']
    #allocation4 [shape = 's32[1]{0}', space=sflag, size = 0x4, scoped, tag = 'scoped memory for tpu_custom_call.1']
    #allocation5 [shape = 's32[1]{0}', space=sflag, size = 0x4, scoped, tag = 'scoped memory for tpu_custom_call.1']
    #allocation6 [shape = 'u8[8192]{0}', space=vmem, size = 0x2000, scoped, tag = 'input window, operand 1, single buffered']
    #allocation7 [shape = 's32[1]{0}', space=sflag, size = 0x4, scoped, tag = 'scoped memory for tpu_custom_call.1']
    #allocation8 [shape = 'u8[4096]{0}', space=vmem, size = 0x1000, scoped, tag = 'output window, operand 0, single buffered']
    %7 = vsyncpa [#allocation4], 0
    %8 = vsyncpa [#allocation7], 0
    %9 = vsyncpa [#allocation5], 0
    // Predicated region
    $region2: #{tpu_custom_call.1} parent=1 // pred_check
      _
    $region3: #{tpu_custom_call.1} parent=1 // pred_check_branch
      %11 = sbr.rel (0) target = $region5
    $region4: #{tpu_custom_call.1} parent=1 // pred_region
      %s12 = sadd.s32 0, 0
      %p13 = scmp.lt.s32.totalorder %s12, 0
      %s14 = scalar_select %p13, %s12, 0
      %s16 = ssub.s32 256, 256
      %17 = vsyncadd [#allocation4], %s16
      %s18 = smul.addr %s14, 4
      %s19 = smul.addr %s18, 64
      %s20 = scalar_lea.hbm %s0, %s19
      %s22 = sshll.u32 [#allocation3], 4
      %s23 = int_to_ptr.vmem [resolvable:$true] %s22
      %25 = dma.hbm_to_vmem [thread:$0]  %s20, 256, %s23, [#allocation4]
    $region5: #{tpu_custom_call.1} parent=1 // pred_fallthru
      _
    // Predicated region
    $region6: #{tpu_custom_call.1} parent=1 // pred_check
      _
    $region7: #{tpu_custom_call.1} parent=1 // pred_check_branch
      %27 = sbr.rel (0) target = $region9
    $region8: #{tpu_custom_call.1} parent=1 // pred_region
      %s28 = sadd.s32 0, 0
      %p29 = scmp.lt.s32.totalorder %s28, 0
      %s30 = scalar_select %p29, %s28, 0
      %s32 = ssub.s32 256, 256
      %33 = vsyncadd [#allocation7], %s32
      %s34 = smul.addr %s30, 4
      %s35 = smul.addr %s34, 64
      %s36 = scalar_lea.hbm %s1, %s35
      %s38 = sshll.u32 [#allocation6], 4
      %s39 = int_to_ptr.vmem [resolvable:$true] %s38
      %41 = dma.hbm_to_vmem [thread:$0]  %s36, 256, %s39, [#allocation7]
    $region9: #{tpu_custom_call.1} parent=1 // pred_fallthru
      _
    // Predicated region
    $region10: #{tpu_custom_call.1} parent=1 // pred_check
      _
    $region11: #{tpu_custom_call.1} parent=1 // pred_check_branch
      %43 = sbr.rel (0) target = $region13
    $region12: #{tpu_custom_call.1} parent=1 // pred_region
      %44 = dma.done [#allocation4], 256
    $region13: #{tpu_custom_call.1} parent=1 // pred_fallthru
      _
    // Predicated region
    $region14: #{tpu_custom_call.1} parent=1 // pred_check
      _
    $region15: #{tpu_custom_call.1} parent=1 // pred_check_branch
      %46 = sbr.rel (0) target = $region17
    $region16: #{tpu_custom_call.1} parent=1 // pred_region
      %47 = dma.done [#allocation7], 256
    $region17: #{tpu_custom_call.1} parent=1 // pred_fallthru
      _
    %s48 = sadd.s32 0, 0
    %p49 = scmp.lt.s32.totalorder %s48, 0
    %s50 = scalar_select %p49, %s48, 0
    %s51 = sadd.s32 0, 0
    %p52 = scmp.lt.s32.totalorder %s51, 0
    %s53 = scalar_select %p52, %s51, 0
    %p54 = scmp.eq.s32.totalorder 0, 0
    // Predicated region
    $region18: #{tpu_custom_call.1} parent=1 // pred_check
      %p55 = pneg %p54
    $region19: #{tpu_custom_call.1} parent=1 // pred_check_branch
      %57 = sbr.rel (%p55) target = $region21
    $region20: #{tpu_custom_call.1} parent=1 // pred_region
      %58 = vst [vmem:[#allocation2] sm:$0xff] 0.0
      %59 = vst [vmem:[#allocation2 + $0x8] sm:$0xff] 0.0
      %60 = vst [vmem:[#allocation2 + $0x10] sm:$0xff] 0.0
      %61 = vst [vmem:[#allocation2 + $0x18] sm:$0xff] 0.0
    $region21: #{tpu_custom_call.1} parent=1 // pred_fallthru
      _
    %v62 = vld [vmem:[#allocation3] sm:$0xff]
    %v63 = vld [vmem:[#allocation3 + $0x8] sm:$0xff]
    %v64 = vld [vmem:[#allocation6] sm:$0xff]
    %v65 = vld [vmem:[#allocation6 + $0x8] sm:$0xff]
    %v66 = vsub.f32 %v62, %v64
    %v67 = vsub.f32 %v63, %v65
    %v68 = vmul.f32 %v66, %v66
    %v69 = vmul.f32 %v67, %v67
    %v70 = vld [vmem:[#allocation2] ss:$8 sm:$0xf]
    %v73 = vcombine.high %v68, %v68
    %v74 = vcombine.high %v69, %v69
    %vm77 = vcmask 1043456
    %v78 = vsel %vm77, %v68, 0.0
    %v79 = vrot.slane %v78, 4
    %v80 = vadd.f32 %v78, %v79
    %v81 = vrot.slane %v80, 2
    %v82 = vadd.f32 %v80, %v81
    %v83 = vrot.slane %v82, 1
    %v84 = vadd.f32 %v82, %v83
    %v85 = vsel %vm77, %v73, 0.0
    %v86 = vrot.slane %v85, 4
    %v87 = vadd.f32 %v85, %v86
    %v88 = vrot.slane %v87, 2
    %v89 = vadd.f32 %v87, %v88
    %v90 = vrot.slane %v89, 1
    %v91 = vadd.f32 %v89, %v90
    %v92 = vsel %vm77, %v69, 0.0
    %v93 = vrot.slane %v92, 4
    %v94 = vadd.f32 %v92, %v93
    %v95 = vrot.slane %v94, 2
    %v96 = vadd.f32 %v94, %v95
    %v97 = vrot.slane %v96, 1
    %v98 = vadd.f32 %v96, %v97
    %v99 = vsel %vm77, %v74, 0.0
    %v100 = vrot.slane %v99, 4
    %v101 = vadd.f32 %v99, %v100
    %v102 = vrot.slane %v101, 2
    %v103 = vadd.f32 %v101, %v102
    %v104 = vrot.slane %v103, 1
    %v105 = vadd.f32 %v103, %v104
    %v110 = vcombine.low %v84, %v91
    %v111 = vcombine.low %v98, %v105
    %v113 = vunpack.c.l.s4 1966171168
    %v114 = vunpack.c.0.s8 %v113
    %v115 = vlaneseq
    %v116 = vshrl.u32 %v115, 7
    %v117 = vsub.s32 %v114, %v116
    %v118 = vrot.slane %v110, %v117
    %v120 = vunpack.c.l.s4 1966171168
    %v121 = vunpack.c.0.s8 %v120
    %v122 = vlaneseq
    %v123 = vshrl.u32 %v122, 7
    %v124 = vsub.s32 %v121, %v123
    %v125 = vrot.slane %v111, %v124
    %v126 = vcombine.low %v118, %v125
    %v128 = vunpack.c.l.s4 1966171168
    %v129 = vunpack.c.0.s8 %v128
    %v130 = vlaneseq
    %v131 = vshrl.u32 %v130, 7
    %v132 = vsub.s32 %v129, %v131
    %v133 = vrot.slane %v126, %v132
    %v135 = vadd.f32 %v70, %v133
    %v136 = vlaneseq
    %vm137 = vcmp.ge.s32.totalorder %v136, 0
    %vm138 = vcmp.lt.s32.totalorder %v136, 512
    %vm139 = vmand %vm137, %vm138
    %140 = vst.msk [vmem:[#allocation2] ss:$8 sm:$0xf] %vm139, %v135
    %141 = vst.msk [vmem:[#allocation2] ss:$8 sm:$0x0] %vm139, %v135
    // Predicated region
    $region22: #{tpu_custom_call.1} parent=1 // pred_check
      %p142 = pneg %p54
    $region23: #{tpu_custom_call.1} parent=1 // pred_check_branch
      %144 = sbr.rel (%p142) target = $region25
    $region24: #{tpu_custom_call.1} parent=1 // pred_region
      %v145 = vld [vmem:[#allocation2] sm:$0xff]
      %v146 = vld [vmem:[#allocation2 + $0x8] sm:$0xff]
      %v147 = vld [vmem:[#allocation2 + $0x10] sm:$0xff]
      %v148 = vld [vmem:[#allocation2 + $0x18] sm:$0xff]
      %v149 = vadd.f32 %v145, %v146
      %v150 = vadd.f32 %v149, %v147
      %v151 = vadd.f32 %v150, %v148
      %152 = vadd.xlane.f32.xlu0 %v151
      %v153 = vpop.xlane.xlu0 %152
      %v154 = vrot.slane %v153, 4
      %v155 = vadd.f32 %v153, %v154
      %v156 = vrot.slane %v155, 2
      %v157 = vadd.f32 %v155, %v156
      %v158 = vrot.slane %v157, 1
      %v159 = vadd.f32 %v157, %v158
      %s160 = vtos %v159
      %v161 = vstv %s160
      %v162 = vadd.f32 %v161, 0.0
      %163 = vst [vmem:[#allocation8] sm:$0xff] %v162
    $region25: #{tpu_custom_call.1} parent=1 // pred_fallthru
      _
    // Predicated region
    $region26: #{tpu_custom_call.1} parent=1 // pred_check
      _
    $region27: #{tpu_custom_call.1} parent=1 // pred_check_branch
      %165 = sbr.rel (0) target = $region29
    $region28: #{tpu_custom_call.1} parent=1 // pred_region
      %s167 = ssub.s32 128, 128
      %168 = vsyncadd [#allocation5], %s167
      %s170 = sshll.u32 [#allocation8], 4
      %s171 = int_to_ptr.vmem [resolvable:$true] %s170
      %173 = dma.vmem_to_hbm [thread:$0]  %s171, 128, %s2, [#allocation5]
    $region29: #{tpu_custom_call.1} parent=1 // pred_fallthru
      _
    // Predicated region
    $region30: #{tpu_custom_call.1} parent=1 // pred_check
      _
    $region31: #{tpu_custom_call.1} parent=1 // pred_check_branch
      %175 = sbr.rel (0) target = $region33
    $region32: #{tpu_custom_call.1} parent=1 // pred_region
      %176 = dma.done [#allocation5], 128
    $region33: #{tpu_custom_call.1} parent=1 // pred_fallthru
      _
    %177 = vsyncpa [#allocation4], 1
    %178 = vsyncpa [#allocation7], 1
    %179 = vsyncpa [#allocation5], 1

</llo_original>
